<compile_context>
chip_gen: v7x
topology: tpu7x:2x2x1
jax: 0.10.0
libtpu: 0.0.40
codegen_flags: <defaults>
</compile_context>

<pallas_src>
import math

import jax
import jax.numpy as jnp
from jax.experimental import pallas as pl
from jax.experimental.pallas import tpu as pltpu


def _copy_kernel(x_ref, o_ref):
    # Pure whole-tile copy: lane-dense, DMA/HBM bound; no VPU/XLU work.
    o_ref[...] = x_ref[...]


def _sublane_multiple(dtype):
    # Sub-32-bit dtypes pack along sublanes: 8 rows (f32), 16 (bf16), 32 (i8/fp8).
    itemsize = jnp.dtype(dtype).itemsize
    return {4: 8, 2: 16, 1: 32}.get(itemsize, 8)


def _vmem_budget():
    """(vmem_limit_bytes, target_block_bytes) sized per generation."""
    try:
        cap = pltpu.get_tpu_info().vmem_capacity_bytes
    except Exception:
        cap = 64 << 20  # conservative: assume v7x-sized VMEM
    if cap >= (128 << 20):          # v5e / v6e
        return 96 << 20, 16 << 20   # 2 bufs * (in+out) * 16 MiB = 64 MiB < 96 MiB
    return 48 << 20, 8 << 20        # v7x: 4 * 8 MiB = 32 MiB < 48 MiB < 64 MiB


def _pick_tiles(rows, cols, dtype, target_block_bytes):
    """Fixed tiles for a (rows, cols) copy; used with pl.cdiv grids."""
    itemsize = jnp.dtype(dtype).itemsize
    sub = _sublane_multiple(dtype)
    # Lane axis: full extent when it fits, otherwise a 128-multiple tile
    # (edge block is masked by the cdiv grid).
    tc = cols if cols <= 4096 else 4096
    # Row axis: fill the block-byte target, sublane-aligned; full extent if small.
    max_rows = max(1, target_block_bytes // (tc * itemsize))
    if max_rows >= rows:
        tr = rows                                   # full-extent dim: always legal
    else:
        tr = max(sub, (max_rows // sub) * sub)      # aligned; edge masked via cdiv
    return tr, tc


def _flatten_materialize(x2):
    """Explicit Pallas copy of the already-flattened (B, F) array."""
    B, F = x2.shape
    dtype = x2.dtype
    itemsize = jnp.dtype(dtype).itemsize
    total = B * F
    vmem_limit, target_block = _vmem_budget()

    # Re-tile as a flat lane-dense slab independent of (B, F) when possible.
    if total % 128 == 0:
        upper = (min(4096, total) // 128) * 128
        C = 128
        for c in range(upper, 0, -128):
            if total % c == 0:
                C = c
                break
        rows, cols = total // C, C
        slab = x2.reshape(rows, cols)               # metadata-only reshape
    else:
        rows, cols = B, F
        slab = x2

    tr, tc = _pick_tiles(rows, cols, dtype, target_block)
    grid = (pl.cdiv(rows, tr), pl.cdiv(cols, tc))

    out = pl.pallas_call(
        _copy_kernel,
        out_shape=jax.ShapeDtypeStruct((rows, cols), dtype),
        grid_spec=pl.GridSpec(
            grid=grid,
            in_specs=[pl.BlockSpec((tr, tc), lambda i, j: (i, j))],
            out_specs=pl.BlockSpec((tr, tc), lambda i, j: (i, j)),
        ),
        compiler_params=pltpu.CompilerParams(
            # Pure copy: both axes are independent -> shard across TensorCores.
            dimension_semantics=("parallel", "parallel"),
            vmem_limit_bytes=vmem_limit,
        ),
        cost_estimate=pl.CostEstimate(
            flops=0, transcendentals=0, bytes_accessed=2 * total * itemsize),
    )(slab)
    return out.reshape(B, F)


def flatten(x, *, materialize=False):
    """Pallas/JAX equivalent of torch Flatten: (B, ...) -> (B, prod(...)).

    Default is the metadata-only reshape (identical semantics to
    torch .view(B, -1) on contiguous input, zero HBM traffic).  Set
    materialize=True only when an explicit copied buffer is required.
    """
    B = x.shape[0]
    F = math.prod(x.shape[1:]) if x.ndim > 1 else 1
    x2 = x.reshape(B, F)
    if not materialize:
        return x2
    return _flatten_materialize(x2)


if __name__ == "__main__":
    key = jax.random.PRNGKey(0)
    # Small LeNet-ish activation map: batch=2, channels=4, spatial=16x16.
    x = jax.random.normal(key, (2, 4, 16, 16), dtype=jnp.float32)
    ref = x.reshape(x.shape[0], -1)

    # Default (recommended) path: metadata-only flatten.
    out_view = flatten(x)
    jax.block_until_ready(out_view)
    assert out_view.shape == (2, 4 * 16 * 16), out_view.shape
    assert jnp.array_equal(out_view, ref), "flatten (view) mismatch"

    # Explicit Pallas copy path (only if a materialized copy is required).
    out_copy = flatten(x, materialize=True)
    jax.block_until_ready(out_copy)
    assert out_copy.shape == (2, 4 * 16 * 16), out_copy.shape
    assert jnp.array_equal(out_copy, ref), "flatten (pallas copy) mismatch"

    print("KERNEL_OK")
</pallas_src>

<mosaic_0001>
module attributes {stable_mosaic.version = 11 : i64} {
  func.func @_copy_kernel(%arg0: i32, %arg1: i32, %arg2: memref<1x2048xf32, #tpu.memory_space<vmem>>, %arg3: memref<1x2048xf32, #tpu.memory_space<vmem>>) attributes {dimension_semantics = [#tpu.dimension_semantics<parallel>, #tpu.dimension_semantics<parallel>], iteration_bounds = array<i64: 1, 1>, scalar_prefetch = 0 : i64, scratch_operands = 0 : i64, tpu.core_type = #tpu.core_type<tc>, window_params = [{transform_indices = @transform_0, window_bounds = array<i64: 1, 2048>}, {transform_indices = @transform_1, window_bounds = array<i64: 1, 2048>}]} {
    %c0 = arith.constant 0 : index
    %c0_0 = arith.constant 0 : index
    %0 = vector.load %arg2[%c0, %c0_0] : memref<1x2048xf32, #tpu.memory_space<vmem>>, vector<1x2048xf32>
    %c0_1 = arith.constant 0 : index
    %c0_2 = arith.constant 0 : index
    %1 = vector.load %arg3[%c0_1, %c0_2] : memref<1x2048xf32, #tpu.memory_space<vmem>>, vector<1x2048xf32>
    tpu.vector_store %arg3[%c0_1, %c0_2], %0 {strides = array<i32>} : memref<1x2048xf32, #tpu.memory_space<vmem>>, vector<1x2048xf32>,
    return
  }
  func.func @transform_0(%arg0: i32, %arg1: i32) -> (i32, i32) {
    %c0_i32 = arith.constant 0 : i32
    return %arg0, %arg1 : i32, i32
  }
  func.func @transform_1(%arg0: i32, %arg1: i32) -> (i32, i32) {
    %c0_i32 = arith.constant 0 : i32
    return %arg0, %arg1 : i32, i32
  }
}

</mosaic_0001>

<llo_original>
// kernel: tpu_custom_call.1
$region0: #{tpu_custom_call.1}
  #allocation0 [shape = 'u32[]', space=smem, size = 0x4, offset = 0x4, fixed_abs, tag = 'smem constant byte address 0x4 - core index']
  #allocation1 [shape = 'u32[144,128]{1,0:T(1,128)}', space=vmem, size = 0x12000, scoped, tag = 'internal scratch']
  %s0 = inlined_call_operand.hbm [shape: f32[1,2048], index: 0, kind: input, shape index: {}]
  %s1 = inlined_call_operand.hbm [shape: f32[1,2048], index: 1, kind: output, shape index: {}]
  %s2 = sld [smem:[#allocation0]]
  $region18: #{tpu_custom_call.1} parent=0
    _
  %s4 = ssub.s32 1, %s2
  %s5 = scalar_select 0, %s4, %s2
  $region1: #{tpu_custom_call.1} parent=0
    #allocation2 [shape = 'u8[8192]{0}', space=vmem, size = 0x2000, scoped, tag = 'input window, operand 0, single buffered']
    #allocation3 [shape = 's32[1]{0}', space=sflag, size = 0x4, scoped, tag = 'scoped memory for tpu_custom_call.1']
    #allocation4 [shape = 's32[1]{0}', space=sflag, size = 0x4, scoped, tag = 'scoped memory for tpu_custom_call.1']
    #allocation5 [shape = 'u8[8192]{0}', space=vmem, size = 0x2000, scoped, tag = 'output window, operand 0, single buffered']
    %6 = vsyncpa [#allocation3], 0
    %7 = vsyncpa [#allocation4], 0
    // Predicated region
    $region2: #{tpu_custom_call.1} parent=1 // pred_check
      _
    $region3: #{tpu_custom_call.1} parent=1 // pred_check_branch
      %9 = sbr.rel (0) target = $region5
    $region4: #{tpu_custom_call.1} parent=1 // pred_region
      %s11 = ssub.s32 256, 256
      %12 = vsyncadd [#allocation3], %s11
      %s14 = sshll.u32 [#allocation2], 4
      %s15 = int_to_ptr.vmem [resolvable:$true] %s14
      %17 = dma.hbm_to_vmem [thread:$0]  %s0, 256, %s15, [#allocation3]
    $region5: #{tpu_custom_call.1} parent=1 // pred_fallthru
      _
    // Predicated region
    $region6: #{tpu_custom_call.1} parent=1 // pred_check
      _
    $region7: #{tpu_custom_call.1} parent=1 // pred_check_branch
      %19 = sbr.rel (0) target = $region9
    $region8: #{tpu_custom_call.1} parent=1 // pred_region
      %20 = dma.done [#allocation3], 256
    $region9: #{tpu_custom_call.1} parent=1 // pred_fallthru
      _
    %v21 = vld [vmem:[#allocation2] sm:$0xff]
    %v22 = vld [vmem:[#allocation2 + $0x8] sm:$0xff]
    %23 = vst [vmem:[#allocation5] sm:$0xff] %v21
    %24 = vst [vmem:[#allocation5 + $0x8] sm:$0xff] %v22
    // Predicated region
    $region10: #{tpu_custom_call.1} parent=1 // pred_check
      _
    $region11: #{tpu_custom_call.1} parent=1 // pred_check_branch
      %26 = sbr.rel (0) target = $region13
    $region12: #{tpu_custom_call.1} parent=1 // pred_region
      %s28 = ssub.s32 256, 256
      %29 = vsyncadd [#allocation4], %s28
      %s31 = sshll.u32 [#allocation5], 4
      %s32 = int_to_ptr.vmem [resolvable:$true] %s31
      %34 = dma.vmem_to_hbm [thread:$0]  %s32, 256, %s1, [#allocation4]
    $region13: #{tpu_custom_call.1} parent=1 // pred_fallthru
      _
    // Predicated region
    $region14: #{tpu_custom_call.1} parent=1 // pred_check
      _
    $region15: #{tpu_custom_call.1} parent=1 // pred_check_branch
      %36 = sbr.rel (0) target = $region17
    $region16: #{tpu_custom_call.1} parent=1 // pred_region
      %37 = dma.done [#allocation4], 256
    $region17: #{tpu_custom_call.1} parent=1 // pred_fallthru
      _
    %38 = vsyncpa [#allocation3], 1
    %39 = vsyncpa [#allocation4], 1

</llo_original>
